<compile_context>
chip_gen: v5e
topology: v5e:2x2
jax: 0.10.0
libtpu: 0.0.40
codegen_flags: <defaults>
</compile_context>

<pallas_src>
import functools

import jax
import jax.numpy as jnp
from jax.experimental import pallas as pl
from jax.experimental.pallas import tpu as pltpu

UNK_INDEX = 0
PAD_INDEX = 1


def _round_up(x, m):
    return (x + m - 1) // m * m


def _copy_gen_loss_kernel(scores_ref, align_ref, target_ref, loss_ref,
                          vprob_acc, cprob_acc, *,
                          vocab_size, unk_index, ignore_index, eps, force_copy,
                          tile_c, num_c_tiles, k_last_vocab, k_first_copy):
    k = pl.program_id(1)  # C-tile index (innermost, reduction axis)

    @pl.when(k == 0)
    def _init():
        vprob_acc[...] = jnp.zeros_like(vprob_acc)
        cprob_acc[...] = jnp.zeros_like(cprob_acc)

    target = target_ref[...]                       # (tile_n, 1) int32
    align = align_ref[...]                         # (tile_n, 1) int32

    lane = jax.lax.broadcasted_iota(jnp.int32, (1, 128), 1)   # hoisted
    col_base = k * tile_c
    groups = tile_c // 128

    def accumulate(acc_ref, idx):
        # One-hot masked accumulation into per-lane partial sums, in the
        # scores' native dtype (exact: at most one non-zero match per row).
        part = acc_ref[...]                        # (tile_n, 128)
        for g in range(groups):                    # 128-aligned lane slices: free
            cols = lane + (col_base + g * 128)     # global column ids, (1, 128)
            sg = scores_ref[:, g * 128:(g + 1) * 128]
            part = part + jnp.where(cols == idx, sg, 0.0)
        acc_ref[...] = part

    def gather_target():
        # scores.gather(1, target): target < vocab_size <= C, so padded /
        # out-of-range lanes (cols >= C) can never match.
        accumulate(vprob_acc, target)

    def gather_copy():
        # scores.gather(1, align + vocab_size): copy index < C by construction.
        accumulate(cprob_acc, align + vocab_size)

    # Statically skip compares on C tiles that cannot contain the gathered column.
    if k_last_vocab >= num_c_tiles - 1:
        gather_target()                      # every tile overlaps [0, vocab)
    else:
        pl.when(k <= k_last_vocab)(gather_target)

    if k_first_copy <= 0:
        gather_copy()                        # every tile overlaps [vocab, C)
    else:
        pl.when(k >= k_first_copy)(gather_copy)

    @pl.when(k == num_c_tiles - 1)
    def _finalize():
        # Single cross-lane reduce + f32 math only here.
        vocab_probs = jnp.sum(vprob_acc[...].astype(jnp.float32),
                              axis=1, keepdims=True) + eps
        copy_sum = jnp.sum(cprob_acc[...].astype(jnp.float32),
                           axis=1, keepdims=True)
        is_unk = align == unk_index
        copy_tok = jnp.where(is_unk, 0.0, copy_sum) + eps
        non_copy = is_unk
        if not force_copy:
            non_copy = non_copy | (target != unk_index)
        probs = jnp.where(non_copy, copy_tok + vocab_probs, copy_tok)
        loss = -jnp.log(probs)
        loss_ref[...] = jnp.where(target == ignore_index, 0.0, loss)


def _pick_tiles(n, c, itemsize, vmem_cap, tile_n, tile_c):
    # Sublane multiple for the scores dtype (8 f32, 16 bf16, 32 int8/fp8).
    sub = max(8, 32 // itemsize)
    if tile_n is None:
        tile_n = 256
    tile_n = max(sub, _round_up(min(tile_n, n), sub))
    # v7x megacore: keep >= 2 tiles on the parallel N axis whenever N allows it.
    if n >= 2 * sub and pl.cdiv(n, tile_n) < 2:
        tile_n = _round_up(pl.cdiv(n, 2), sub)
    c_full = _round_up(c, 128)
    if tile_c is None:
        # Per-block scores budget: ~1/8 of physical VMEM (x2 for double-buffering),
        # capped so the unrolled lane-group count stays moderate.
        budget = max(vmem_cap // 8, 4 << 20)
        tile_c = max(128, (budget // (tile_n * itemsize)) // 128 * 128)
        tile_c = min(tile_c, 8192)
    tile_c = min(max(128, _round_up(tile_c, 128)), c_full)
    return tile_n, tile_c


def copy_generator_loss(scores, align, target, batch_size, *,
                        vocab_size, force_copy=True,
                        unk_index=UNK_INDEX, ignore_index=PAD_INDEX,
                        eps=1e-20, tile_n=None, tile_c=None):
    """scores: (N, vocab+svocab) (any float dtype, streamed natively, no pad);
    align, target: (N,) int, with target < vocab_size and align < svocab
    (same precondition as torch.gather).  Returns per-example loss (batch_size,)."""
    n, c = scores.shape
    assert n % batch_size == 0, "N must be tgt_len * batch_size"
    tgt_len = n // batch_size
    itemsize = jnp.dtype(scores.dtype).itemsize

    try:
        vmem_cap = int(getattr(pltpu.get_tpu_info(), "vmem_capacity_bytes",
                               128 * 1024 * 1024))
    except Exception:
        vmem_cap = 128 * 1024 * 1024

    tile_n, tile_c = _pick_tiles(n, c, itemsize, vmem_cap, tile_n, tile_c)

    num_n_tiles = pl.cdiv(n, tile_n)
    num_c_tiles = pl.cdiv(c, tile_c)
    k_last_vocab = max(vocab_size - 1, 0) // tile_c   # last C tile touching vocab region
    k_first_copy = vocab_size // tile_c               # first C tile touching copy region

    # Only the tiny index vectors get reshaped; the (N, C) scores go in as-is.
    align2 = align.astype(jnp.int32).reshape(n, 1)
    target2 = target.astype(jnp.int32).reshape(n, 1)

    kernel = functools.partial(
        _copy_gen_loss_kernel,
        vocab_size=vocab_size, unk_index=unk_index, ignore_index=ignore_index,
        eps=eps, force_copy=force_copy, tile_c=tile_c,
        num_c_tiles=num_c_tiles, k_last_vocab=k_last_vocab,
        k_first_copy=k_first_copy)

    # vmem limit derived from the chosen blocks (2x double-buffered scores
    # block + lane-partial scratch + headroom), capped at 3/4 of physical VMEM.
    scores_block = tile_n * tile_c * itemsize
    scratch_bytes = 2 * tile_n * 128 * itemsize
    small_blocks = 2 * 3 * tile_n * 4
    vmem_limit = 2 * scores_block + scratch_bytes + small_blocks + (8 << 20)
    vmem_limit = int(min(max(vmem_limit, 32 << 20), (vmem_cap * 3) // 4))

    loss_rows = pl.pallas_call(
        kernel,
        out_shape=jax.ShapeDtypeStruct((n, 1), jnp.float32),
        grid_spec=pltpu.PrefetchScalarGridSpec(
            num_scalar_prefetch=0,
            grid=(num_n_tiles, num_c_tiles),
            in_specs=[
                pl.BlockSpec((tile_n, tile_c), lambda i, k: (i, k)),   # scores
                pl.BlockSpec((tile_n, 1), lambda i, k: (i, 0)),        # align
                pl.BlockSpec((tile_n, 1), lambda i, k: (i, 0)),        # target
            ],
            out_specs=pl.BlockSpec((tile_n, 1), lambda i, k: (i, 0)),
            scratch_shapes=[pltpu.VMEM((tile_n, 128), scores.dtype),
                            pltpu.VMEM((tile_n, 128), scores.dtype)]),
        compiler_params=pltpu.CompilerParams(
            dimension_semantics=("parallel", "arbitrary"),
            vmem_limit_bytes=vmem_limit),
    )(scores, align2, target2)

    # loss.view(tgt_len, B).T.sum(1) / denom : tiny O(N) epilogue in the wrapper.
    loss = loss_rows[:, 0].reshape(tgt_len, batch_size)
    denom = (target.reshape(tgt_len, batch_size) != ignore_index)
    denom = denom.astype(jnp.float32).sum(axis=0)
    # TODO(synk): like the PyTorch module, an all-padding batch column yields denom == 0 (NaN).
    return jnp.sum(loss, axis=0) / denom


def _reference(scores, align, target, batch_size, *, vocab_size, force_copy,
               unk_index, ignore_index, eps):
    n = scores.shape[0]
    vocab_probs = scores[jnp.arange(n), target] + eps
    copy_tok = scores[jnp.arange(n), align + vocab_size]
    copy_tok = jnp.where(align == unk_index, 0.0, copy_tok) + eps
    non_copy = align == unk_index
    if not force_copy:
        non_copy = non_copy | (target != unk_index)
    probs = jnp.where(non_copy, copy_tok + vocab_probs, copy_tok)
    loss = -jnp.log(probs)
    loss = jnp.where(target == ignore_index, 0.0, loss)
    loss = loss.reshape(-1, batch_size)
    denom = (target != ignore_index).astype(jnp.float32).reshape(-1, batch_size).sum(0)
    return loss.sum(0) / denom


if __name__ == "__main__":
    key = jax.random.PRNGKey(0)

    def run_case(case_key, tgt_len, batch_size, vocab_size, svocab, *,
                 force_copy, dtype, tile_n=None, tile_c=None):
        n = tgt_len * batch_size
        c = vocab_size + svocab
        k1, k2, k3 = jax.random.split(case_key, 3)
        # scores behave like probabilities (positive) in the original module
        scores = jax.nn.softmax(jax.random.normal(k1, (n, c), jnp.float32), -1)
        scores = scores.astype(dtype)
        # targets in [2, vocab_size) so denom is never zero; align in [0, svocab)
        target = jax.random.randint(k2, (n,), 2, vocab_size, dtype=jnp.int32)
        align = jax.random.randint(k3, (n,), 0, svocab, dtype=jnp.int32)
        # sprinkle in an unk align and a padded target position
        align = align.at[3].set(UNK_INDEX)
        target = target.at[5].set(PAD_INDEX)

        out = copy_generator_loss(scores, align, target, batch_size,
                                  vocab_size=vocab_size, force_copy=force_copy,
                                  tile_n=tile_n, tile_c=tile_c)
        out = jax.block_until_ready(out)

        ref = _reference(scores.astype(jnp.float32), align, target, batch_size,
                         vocab_size=vocab_size, force_copy=force_copy,
                         unk_index=UNK_INDEX, ignore_index=PAD_INDEX, eps=1e-20)
        assert out.shape == (batch_size,)
        assert jnp.allclose(out, ref, rtol=1e-5, atol=1e-5), (out, ref)

    k1, k2, k3 = jax.random.split(key, 3)
    # Case 1: shapes from the original demo (auto tiles, f32, ragged C < 128,
    # auto-split of the parallel N axis into 2 tiles).
    run_case(k1, 8, 2, 24, 8, force_copy=True, dtype=jnp.float32)
    # Case 2: multi-tile grid with explicit tiny tiles, bf16 streaming,
    # force_copy=False, static per-C-tile compare skipping, ragged C tail.
    run_case(k2, 25, 3, 128, 140, force_copy=False, dtype=jnp.bfloat16,
             tile_n=16, tile_c=128)
    # Case 3: auto tiles with ragged N (partial edge N block) and ragged C.
    run_case(k3, 7, 5, 300, 77, force_copy=True, dtype=jnp.float32)

    print("KERNEL_OK")
</pallas_src>

<mosaic_0001>
module attributes {stable_mosaic.version = 11 : i64} {
  func.func @_copy_gen_loss_kernel(%arg0: i32, %arg1: i32, %arg2: memref<8x128xf32, #tpu.memory_space<vmem>>, %arg3: memref<8x1xi32, #tpu.memory_space<vmem>>, %arg4: memref<8x1xi32, #tpu.memory_space<vmem>>, %arg5: memref<8x1xf32, #tpu.memory_space<vmem>>, %arg6: memref<8x128xf32, #tpu.memory_space<vmem>>, %arg7: memref<8x128xf32, #tpu.memory_space<vmem>>) attributes {dimension_semantics = [#tpu.dimension_semantics<parallel>, #tpu.dimension_semantics<arbitrary>], iteration_bounds = array<i64: 2, 1>, scalar_prefetch = 0 : i64, scratch_operands = 2 : i64, tpu.core_type = #tpu.core_type<tc>, window_params = [{transform_indices = @transform_0, window_bounds = array<i64: 8, 128>}, {transform_indices = @transform_1, window_bounds = array<i64: 8, 1>}, {transform_indices = @transform_2, window_bounds = array<i64: 8, 1>}, {transform_indices = @transform_3, window_bounds = array<i64: 8, 1>}]} {
    %c0_i32 = arith.constant 0 : i32
    %0 = arith.cmpi eq, %arg1, %c0_i32 : i32
    %1 = arith.extui %0 : i1 to i32
    %c0_i32_0 = arith.constant 0 : i32
    %2 = arith.cmpi ne, %1, %c0_i32_0 : i32
    scf.if %2 {
      %cst_21 = arith.constant 0.000000e+00 : f32
      %36 = vector.broadcast %cst_21 : f32 to vector<8x128xf32>
      %c0_22 = arith.constant 0 : index
      %c0_23 = arith.constant 0 : index
      %37 = vector.load %arg6[%c0_22, %c0_23] : memref<8x128xf32, #tpu.memory_space<vmem>>, vector<8x128xf32>
      tpu.vector_store %arg6[%c0_22, %c0_23], %36 {strides = array<i32>} : memref<8x128xf32, #tpu.memory_space<vmem>>, vector<8x128xf32>,
      %cst_24 = arith.constant 0.000000e+00 : f32
      %38 = vector.broadcast %cst_24 : f32 to vector<8x128xf32>
      %c0_25 = arith.constant 0 : index
      %c0_26 = arith.constant 0 : index
      %39 = vector.load %arg7[%c0_25, %c0_26] : memref<8x128xf32, #tpu.memory_space<vmem>>, vector<8x128xf32>
      tpu.vector_store %arg7[%c0_25, %c0_26], %38 {strides = array<i32>} : memref<8x128xf32, #tpu.memory_space<vmem>>, vector<8x128xf32>,
    } else {
    }
    %c0 = arith.constant 0 : index
    %c0_1 = arith.constant 0 : index
    %3 = vector.load %arg4[%c0, %c0_1] : memref<8x1xi32, #tpu.memory_space<vmem>>, vector<8x1xi32>
    %c0_2 = arith.constant 0 : index
    %c0_3 = arith.constant 0 : index
    %4 = vector.load %arg3[%c0_2, %c0_3] : memref<8x1xi32, #tpu.memory_space<vmem>>, vector<8x1xi32>
    %5 = tpu.iota {dimensions = array<i32: 1>} : vector<1x128xi32>
    %c128_i32 = arith.constant 128 : i32
    %6 = arith.muli %arg1, %c128_i32 : i32
    %c0_4 = arith.constant 0 : index
    %c0_5 = arith.constant 0 : index
    %7 = vector.load %arg6[%c0_4, %c0_5] : memref<8x128xf32, #tpu.memory_space<vmem>>, vector<8x128xf32>
    %c0_i32_6 = arith.constant 0 : i32
    %8 = arith.addi %6, %c0_i32_6 : i32
    %9 = vector.broadcast %8 : i32 to vector<1x128xi32>
    %10 = arith.addi %5, %9 : vector<1x128xi32>
    %c0_7 = arith.constant 0 : index
    %c0_8 = arith.constant 0 : index
    %11 = vector.load %arg2[%c0_7, %c0_8] : memref<8x128xf32, #tpu.memory_space<vmem>>, vector<8x128xf32>
    %12 = vector.broadcast %10 : vector<1x128xi32> to vector<8x128xi32>
    %13 = vector.broadcast %3 : vector<8x1xi32> to vector<8x128xi32>
    %14 = arith.cmpi eq, %12, %13 : vector<8x128xi32>
    %cst = arith.constant 0.000000e+00 : f32
    %15 = vector.broadcast %cst : f32 to vector<8x128xf32>
    %16 = arith.select %14, %11, %15 : vector<8x128xi1>, vector<8x128xf32>
    %17 = arith.addf %7, %16 : vector<8x128xf32>
    %c0_9 = arith.constant 0 : index
    %c0_10 = arith.constant 0 : index
    %18 = vector.load %arg6[%c0_9, %c0_10] : memref<8x128xf32, #tpu.memory_space<vmem>>, vector<8x128xf32>
    tpu.vector_store %arg6[%c0_9, %c0_10], %17 {strides = array<i32>} : memref<8x128xf32, #tpu.memory_space<vmem>>, vector<8x128xf32>,
    %c24_i32 = arith.constant 24 : i32
    %19 = vector.broadcast %c24_i32 : i32 to vector<8x1xi32>
    %20 = arith.addi %4, %19 : vector<8x1xi32>
    %c0_11 = arith.constant 0 : index
    %c0_12 = arith.constant 0 : index
    %21 = vector.load %arg7[%c0_11, %c0_12] : memref<8x128xf32, #tpu.memory_space<vmem>>, vector<8x128xf32>
    %c0_i32_13 = arith.constant 0 : i32
    %22 = arith.addi %6, %c0_i32_13 : i32
    %23 = vector.broadcast %22 : i32 to vector<1x128xi32>
    %24 = arith.addi %5, %23 : vector<1x128xi32>
    %c0_14 = arith.constant 0 : index
    %c0_15 = arith.constant 0 : index
    %25 = vector.load %arg2[%c0_14, %c0_15] : memref<8x128xf32, #tpu.memory_space<vmem>>, vector<8x128xf32>
    %26 = vector.broadcast %24 : vector<1x128xi32> to vector<8x128xi32>
    %27 = vector.broadcast %20 : vector<8x1xi32> to vector<8x128xi32>
    %28 = arith.cmpi eq, %26, %27 : vector<8x128xi32>
    %cst_16 = arith.constant 0.000000e+00 : f32
    %29 = vector.broadcast %cst_16 : f32 to vector<8x128xf32>
    %30 = arith.select %28, %25, %29 : vector<8x128xi1>, vector<8x128xf32>
    %31 = arith.addf %21, %30 : vector<8x128xf32>
    %c0_17 = arith.constant 0 : index
    %c0_18 = arith.constant 0 : index
    %32 = vector.load %arg7[%c0_17, %c0_18] : memref<8x128xf32, #tpu.memory_space<vmem>>, vector<8x128xf32>
    tpu.vector_store %arg7[%c0_17, %c0_18], %31 {strides = array<i32>} : memref<8x128xf32, #tpu.memory_space<vmem>>, vector<8x128xf32>,
    %c0_i32_19 = arith.constant 0 : i32
    %33 = arith.cmpi eq, %arg1, %c0_i32_19 : i32
    %34 = arith.extui %33 : i1 to i32
    %c0_i32_20 = arith.constant 0 : i32
    %35 = arith.cmpi ne, %34, %c0_i32_20 : i32
    scf.if %35 {
      %c0_21 = arith.constant 0 : index
      %c0_22 = arith.constant 0 : index
      %36 = vector.load %arg6[%c0_21, %c0_22] : memref<8x128xf32, #tpu.memory_space<vmem>>, vector<8x128xf32>
      %cst_23 = arith.constant dense<0.000000e+00> : vector<8xf32>
      %37 = vector.multi_reduction <add>, %36, %cst_23 [1] : vector<8x128xf32> to vector<8xf32>
      %38 = vector.shape_cast %37 : vector<8xf32> to vector<8x1xf32>
      %cst_24 = arith.constant 9.99999968E-21 : f32
      %39 = vector.broadcast %cst_24 : f32 to vector<8x1xf32>
      %40 = arith.addf %38, %39 : vector<8x1xf32>
      %c0_25 = arith.constant 0 : index
      %c0_26 = arith.constant 0 : index
      %41 = vector.load %arg7[%c0_25, %c0_26] : memref<8x128xf32, #tpu.memory_space<vmem>>, vector<8x128xf32>
      %cst_27 = arith.constant dense<0.000000e+00> : vector<8xf32>
      %42 = vector.multi_reduction <add>, %41, %cst_27 [1] : vector<8x128xf32> to vector<8xf32>
      %43 = vector.shape_cast %42 : vector<8xf32> to vector<8x1xf32>
      %c0_i32_28 = arith.constant 0 : i32
      %44 = vector.broadcast %c0_i32_28 : i32 to vector<8x1xi32>
      %45 = arith.cmpi eq, %4, %44 : vector<8x1xi32>
      %cst_29 = arith.constant 0.000000e+00 : f32
      %46 = vector.broadcast %cst_29 : f32 to vector<8x1xf32>
      %47 = arith.select %45, %46, %43 : vector<8x1xi1>, vector<8x1xf32>
      %cst_30 = arith.constant 9.99999968E-21 : f32
      %48 = vector.broadcast %cst_30 : f32 to vector<8x1xf32>
      %49 = arith.addf %47, %48 : vector<8x1xf32>
      %50 = arith.addf %49, %40 : vector<8x1xf32>
      %51 = arith.select %45, %50, %49 : vector<8x1xi1>, vector<8x1xf32>
      %52 = math.log %51 : vector<8x1xf32>
      %cst_31 = arith.constant 0.000000e+00 : f32
      %53 = vector.broadcast %cst_31 : f32 to vector<8x1xf32>
      %54 = arith.subf %53, %52 : vector<8x1xf32>
      %c1_i32 = arith.constant 1 : i32
      %55 = vector.broadcast %c1_i32 : i32 to vector<8x1xi32>
      %56 = arith.cmpi eq, %3, %55 : vector<8x1xi32>
      %cst_32 = arith.constant 0.000000e+00 : f32
      %57 = vector.broadcast %cst_32 : f32 to vector<8x1xf32>
      %58 = arith.select %56, %57, %54 : vector<8x1xi1>, vector<8x1xf32>
      %c0_33 = arith.constant 0 : index
      %c0_34 = arith.constant 0 : index
      %59 = vector.load %arg5[%c0_33, %c0_34] : memref<8x1xf32, #tpu.memory_space<vmem>>, vector<8x1xf32>
      tpu.vector_store %arg5[%c0_33, %c0_34], %58 {strides = array<i32>} : memref<8x1xf32, #tpu.memory_space<vmem>>, vector<8x1xf32>,
    } else {
    }
    return
  }
  func.func @transform_0(%arg0: i32, %arg1: i32) -> (i32, i32) {
    %c0_i32 = arith.constant 0 : i32
    return %arg0, %arg1 : i32, i32
  }
  func.func @transform_1(%arg0: i32, %arg1: i32) -> (i32, i32) {
    %c0_i32 = arith.constant 0 : i32
    %c0_i32_0 = arith.constant 0 : i32
    return %arg0, %c0_i32 : i32, i32
  }
  func.func @transform_2(%arg0: i32, %arg1: i32) -> (i32, i32) {
    %c0_i32 = arith.constant 0 : i32
    %c0_i32_0 = arith.constant 0 : i32
    return %arg0, %c0_i32 : i32, i32
  }
  func.func @transform_3(%arg0: i32, %arg1: i32) -> (i32, i32) {
    %c0_i32 = arith.constant 0 : i32
    %c0_i32_0 = arith.constant 0 : i32
    return %arg0, %c0_i32 : i32, i32
  }
}

</mosaic_0001>

<llo_original>
// kernel: tpu_custom_call.1
$region0: #{tpu_custom_call.1}
  #allocation0 [shape = 'u32[]', space=smem, size = 0x4, offset = 0x4, fixed_abs, tag = 'smem constant byte address 0x4 - core index']
  #allocation1 [shape = 'u32[72,128]{1,0:T(1,128)}', space=vmem, size = 0x9000, scoped, tag = 'internal scratch']
  #allocation2 [shape = 'f32[8,128]{1,0:T(8,128)}', space=vmem, size = 0x1000, scoped, tag = 'scratch operand']
  #allocation3 [shape = 'f32[8,128]{1,0:T(8,128)}', space=vmem, size = 0x1000, scoped, tag = 'scratch operand']
  %s0 = inlined_call_operand.vmem [shape: f32[16,32], index: 0, kind: input, shape index: {}]
  %s1 = inlined_call_operand.vmem [shape: s32[16,1], index: 1, kind: input, shape index: {}]
  %s2 = inlined_call_operand.vmem [shape: s32[16,1], index: 2, kind: input, shape index: {}]
  %s3 = inlined_call_operand.vmem [shape: f32[16,1], index: 3, kind: output, shape index: {}]
  %s4 = sld [smem:[#allocation0]]
  $region53: #{tpu_custom_call.1} parent=0
    _
  %s6 = ssub.s32 1, %s4
  %s7 = scalar_select 0, %s6, %s4
  loop: start=0, step=1, limit=4
  $region2: #{tpu_custom_call.1} parent=0 // loop_pre_header
    _
  $region3: #{tpu_custom_call.1} parent=0 // loop_header
    %s9 = sphi 0, %s13
    %p10 = scmp.ge.s32.totalorder %s9, 4
    %s16 = sphi 0, %s28
    %s17 = sphi 0, %s24
    %s18 = sphi 0, %s16
    %s19 = sphi 0, %s17
    %s20 = sphi 0, %s18
    %s21 = sphi 0, %s19
    %s33 = sphi 0, %s35
    %s36 = sphi 0, %s33
    %s37 = sphi 0, %s36
    %s53 = sphi 0, %s37
    %s59 = sphi 0, %s61
    %s62 = sphi 0, %s59
    %s63 = sphi 0, %s62
    %s79 = sphi 0, %s63
    %s85 = sphi 0, %s87
    %s88 = sphi 0, %s85
    %s89 = sphi 0, %s88
    %s105 = sphi 0, %s89
    %s111 = sphi 0, %s113
    %s114 = sphi 0, %s111
    %s115 = sphi 0, %s114
    %s131 = sphi 0, %s115
  $region4: #{tpu_custom_call.1} parent=0 // loop_header_branch
    %12 = sbr.rel (%p10) target = $region8
  $region5: #{tpu_custom_call.1} parent=0 // loop_body
    %s14 = ssub.s32 %s9, 1
    %s15 = ssub.s32 %s9, 2
    %s22 = sadd.s32 1, %s17
    %p23 = scmp.ge.s32.totalorder %s22, 1
    %s24 = scalar_select %p23, 0, %s22
    %s25 = sadd.s32 1, %s16
    %s26 = scalar_select %p23, %s25, %s16
    %p27 = scmp.ge.s32.totalorder %s26, 2
    %s28 = scalar_select %p27, 0, %s26
    %s29 = ssub.s32 %s16, %s28
    %s30 = ssub.s32 %s17, %s24
    %s31 = sor.u32 %s29, %s30
    %p32 = scmp.eq.s32.totalorder %s31, 0
    %s34 = sadd.s32 %s33, 1
    %s35 = scalar_select %p32, %s33, %s34
    %p38 = pneg %p32
    %p39 = scmp.eq.s32.totalorder %s9, 1
    %p40 = por %p38, %p39
    %p41 = scmp.ne.s32.totalorder %s33, %s36
    %p42 = scmp.eq.s32.totalorder %s9, 0
    %p43 = por %p41, %p42
    %p44 = scmp.ne.s32.totalorder %s33, %s36
    %p45 = scmp.eq.s32.totalorder %s14, 1
    %p46 = por %p44, %p45
    %p47 = scmp.ne.s32.totalorder %s36, %s37
    %p48 = scmp.eq.s32.totalorder %s14, 0
    %p49 = por %p47, %p48
    %p50 = scmp.ne.s32.totalorder %s36, %s37
    %p51 = scmp.eq.s32.totalorder %s15, 1
    %p52 = por %p50, %p51
    %p54 = scmp.ne.s32.totalorder %s37, %s53
    %p55 = scmp.eq.s32.totalorder %s15, 0
    %p56 = por %p54, %p55
    %s57 = ssub.s32 %s16, %s28
    %p58 = scmp.eq.s32.totalorder %s57, 0
    %s60 = sadd.s32 %s59, 1
    %s61 = scalar_select %p58, %s59, %s60
    %p64 = pneg %p58
    %p65 = scmp.eq.s32.totalorder %s9, 1
    %p66 = por %p64, %p65
    %p67 = scmp.ne.s32.totalorder %s59, %s62
    %p68 = scmp.eq.s32.totalorder %s9, 0
    %p69 = por %p67, %p68
    %p70 = scmp.ne.s32.totalorder %s59, %s62
    %p71 = scmp.eq.s32.totalorder %s14, 1
    %p72 = por %p70, %p71
    %p73 = scmp.ne.s32.totalorder %s62, %s63
    %p74 = scmp.eq.s32.totalorder %s14, 0
    %p75 = por %p73, %p74
    %p76 = scmp.ne.s32.totalorder %s62, %s63
    %p77 = scmp.eq.s32.totalorder %s15, 1
    %p78 = por %p76, %p77
    %p80 = scmp.ne.s32.totalorder %s63, %s79
    %p81 = scmp.eq.s32.totalorder %s15, 0
    %p82 = por %p80, %p81
    %s83 = ssub.s32 %s16, %s28
    %p84 = scmp.eq.s32.totalorder %s83, 0
    %s86 = sadd.s32 %s85, 1
    %s87 = scalar_select %p84, %s85, %s86
    %p90 = pneg %p84
    %p91 = scmp.eq.s32.totalorder %s9, 1
    %p92 = por %p90, %p91
    %p93 = scmp.ne.s32.totalorder %s85, %s88
    %p94 = scmp.eq.s32.totalorder %s9, 0
    %p95 = por %p93, %p94
    %p96 = scmp.ne.s32.totalorder %s85, %s88
    %p97 = scmp.eq.s32.totalorder %s14, 1
    %p98 = por %p96, %p97
    %p99 = scmp.ne.s32.totalorder %s88, %s89
    %p100 = scmp.eq.s32.totalorder %s14, 0
    %p101 = por %p99, %p100
    %p102 = scmp.ne.s32.totalorder %s88, %s89
    %p103 = scmp.eq.s32.totalorder %s15, 1
    %p104 = por %p102, %p103
    %p106 = scmp.ne.s32.totalorder %s89, %s105
    %p107 = scmp.eq.s32.totalorder %s15, 0
    %p108 = por %p106, %p107
    %s109 = ssub.s32 %s16, %s28
    %p110 = scmp.eq.s32.totalorder %s109, 0
    %s112 = sadd.s32 %s111, 1
    %s113 = scalar_select %p110, %s111, %s112
    %p116 = pneg %p110
    %p117 = scmp.eq.s32.totalorder %s9, 1
    %p118 = por %p116, %p117
    %p119 = scmp.ne.s32.totalorder %s111, %s114
    %p120 = scmp.eq.s32.totalorder %s9, 0
    %p121 = por %p119, %p120
    %p122 = scmp.ne.s32.totalorder %s111, %s114
    %p123 = scmp.eq.s32.totalorder %s14, 1
    %p124 = por %p122, %p123
    %p125 = scmp.ne.s32.totalorder %s114, %s115
    %p126 = scmp.eq.s32.totalorder %s14, 0
    %p127 = por %p125, %p126
    %p128 = scmp.ne.s32.totalorder %s114, %s115
    %p129 = scmp.eq.s32.totalorder %s15, 1
    %p130 = por %p128, %p129
    %p132 = scmp.ne.s32.totalorder %s115, %s131
    %p133 = scmp.eq.s32.totalorder %s15, 0
    %p134 = por %p132, %p133
    %p135 = scmp.le.s32.totalorder 1, %s9
    %p136 = scmp.lt.s32.totalorder %s9, 3
    %p137 = pnand %p135, %p136
    %p138 = pneg %p137
    // Predicated region
    $region9: #{tpu_custom_call.1} parent=5 // pred_check
      _
    $region10: #{tpu_custom_call.1} parent=5 // pred_check_branch
      %140 = sbr.rel (%p137) target = $region12
    $region11: #{tpu_custom_call.1} parent=5 // pred_region
      %s141 = ssub.s32 %s9, 1
    $region12: #{tpu_custom_call.1} parent=5 // pred_fallthru
      _
    %p142 = scmp.lt.s32.totalorder %s9, 2
    // Predicated region
    $region13: #{tpu_custom_call.1} parent=5 // pred_check
      %p143 = pneg %p142
    $region14: #{tpu_custom_call.1} parent=5 // pred_check_branch
      %145 = sbr.rel (%p143) target = $region16
    $region15: #{tpu_custom_call.1} parent=5 // pred_region
      // Predicated region
      $region17: #{tpu_custom_call.1} parent=15 // pred_check
        %p146 = pneg %p43
      $region18: #{tpu_custom_call.1} parent=15 // pred_check_branch
        %148 = sbr.rel (%p146) target = $region20
      $region19: #{tpu_custom_call.1} parent=15 // pred_region
        %p149 = scmp.lt.s32.totalorder %s16, 1
        %s150 = scalar_select %p149, %s16, 1
        %p151 = scmp.lt.s32.totalorder %s17, 0
        %s152 = scalar_select %p151, %s17, 0
        %s153 = sadd.s32 %s152, %s150
        %s154 = smul.addr %s153, 8
        %s155 = scalar_lea.vmem %s0, %s154
      $region20: #{tpu_custom_call.1} parent=15 // pred_fallthru
        _
      // Predicated region
      $region21: #{tpu_custom_call.1} parent=15 // pred_check
        %p156 = pneg %p69
      $region22: #{tpu_custom_call.1} parent=15 // pred_check_branch
        %158 = sbr.rel (%p156) target = $region24
      $region23: #{tpu_custom_call.1} parent=15 // pred_region
        %p159 = scmp.lt.s32.totalorder %s16, 1
        %s160 = scalar_select %p159, %s16, 1
        %s161 = smul.addr %s160, 8
        %s162 = scalar_lea.vmem %s1, %s161
      $region24: #{tpu_custom_call.1} parent=15 // pred_fallthru
        _
      // Predicated region
      $region25: #{tpu_custom_call.1} parent=15 // pred_check
        %p163 = pneg %p95
      $region26: #{tpu_custom_call.1} parent=15 // pred_check_branch
        %165 = sbr.rel (%p163) target = $region28
      $region27: #{tpu_custom_call.1} parent=15 // pred_region
        %p166 = scmp.lt.s32.totalorder %s16, 1
        %s167 = scalar_select %p166, %s16, 1
        %s168 = smul.addr %s167, 8
        %s169 = scalar_lea.vmem %s2, %s168
      $region28: #{tpu_custom_call.1} parent=15 // pred_fallthru
        _
    $region16: #{tpu_custom_call.1} parent=5 // pred_fallthru
      _
    %p170 = scmp.le.s32.totalorder 1, %s9
    %p171 = scmp.lt.s32.totalorder %s9, 3
    %p172 = pnand %p170, %p171
    %p173 = pneg %p172
    // Predicated region
    $region29: #{tpu_custom_call.1} parent=5 // pred_check
      _
    $region30: #{tpu_custom_call.1} parent=5 // pred_check_branch
      %175 = sbr.rel (%p172) target = $region32
    $region31: #{tpu_custom_call.1} parent=5 // pred_region
      %s176 = ssub.s32 %s9, 1
      %p177 = scmp.lt.s32.totalorder %s18, 1
      %s178 = scalar_select %p177, %s18, 1
      %p179 = scmp.lt.s32.totalorder %s19, 0
      %s180 = scalar_select %p179, %s19, 0
      %s181 = sadd.s32 %s180, %s178
      %s182 = smul.addr %s181, 8
      %s183 = scalar_lea.vmem %s0, %s182
      %p184 = pneg %p49
      %p185 = pneg %p46
      %p186 = scmp.lt.s32.totalorder %s18, 1
      %s187 = scalar_select %p186, %s18, 1
      %s188 = smul.addr %s187, 8
      %s189 = scalar_lea.vmem %s1, %s188
      %p190 = pneg %p75
      %p191 = pneg %p72
      %p192 = scmp.lt.s32.totalorder %s18, 1
      %s193 = scalar_select %p192, %s18, 1
      %s194 = smul.addr %s193, 8
      %s195 = scalar_lea.vmem %s2, %s194
      %p196 = pneg %p101
      %p197 = pneg %p98
      %p198 = pneg %p127
      %p199 = pneg %p124
      %p200 = scmp.lt.s32.totalorder %s18, 1
      %s201 = scalar_select %p200, %s18, 1
      %s202 = smul.addr %s201, 8
      %s203 = scalar_lea.vmem %s3, %s202
      %p204 = scmp.lt.s32.totalorder %s18, 1
      %s205 = scalar_select %p204, %s18, 1
      %p206 = scmp.lt.s32.totalorder %s19, 0
      %s207 = scalar_select %p206, %s19, 0
      %s208 = sadd.s32 %s207, %s205
      %s209 = smul.addr %s208, 8
      %s210 = scalar_lea.vmem %s0, %s209
      %p211 = scmp.lt.s32.totalorder %s18, 1
      %s212 = scalar_select %p211, %s18, 1
      %s213 = smul.addr %s212, 8
      %s214 = scalar_lea.vmem %s1, %s213
      %p215 = scmp.lt.s32.totalorder %s18, 1
      %s216 = scalar_select %p215, %s18, 1
      %s217 = smul.addr %s216, 8
      %s218 = scalar_lea.vmem %s2, %s217
      %p219 = scmp.lt.s32.totalorder %s18, 1
      %s220 = scalar_select %p219, %s18, 1
      %s221 = smul.addr %s220, 8
      %s222 = scalar_lea.vmem %s3, %s221
      %p223 = scmp.eq.s32.totalorder %s19, 0
      // Predicated region
      $region33: #{tpu_custom_call.1} parent=31 // pred_check
        %p224 = pneg %p223
      $region34: #{tpu_custom_call.1} parent=31 // pred_check_branch
        %226 = sbr.rel (%p224) target = $region36
      $region35: #{tpu_custom_call.1} parent=31 // pred_region
        %227 = vst [vmem:[#allocation2] sm:$0xff] 0.0
        %228 = vst [vmem:[#allocation3] sm:$0xff] 0.0
      $region36: #{tpu_custom_call.1} parent=31 // pred_fallthru
        _
      %v229 = vld [vmem:[%s218] sm:$0xff]
      %v230 = vld [vmem:[%s214] sm:$0xff]
      %v231 = vlaneseq
      %v232 = vand.u32 %v231, 127
      %s233 = smul.u32 %s19, 128
      %v234 = vld [vmem:[#allocation2] sm:$0xff]
      %v235 = vstv %s233
      %v236 = vadd.s32 %v232, %v235
      %v237 = vld [vmem:[%s210] sm:$0xff]
      %238 = vset.pattern.permute.xlu0 0
      %239 = vperm.xlu0 %238, %v229
      %v240 = vpop.permute.xlu0 %239
      %vm241 = vcmp.eq.s32.totalorder %v236, %v240
      %v242 = vsel %vm241, %v237, 0.0
      %v243 = vadd.f32 %v234, %v242
      %244 = vst [vmem:[#allocation2] sm:$0xff] %v243
      %v245 = vadd.s32 %v230, 24
      %v246 = vld [vmem:[#allocation3] sm:$0xff]
      %v247 = vld [vmem:[%s210] sm:$0xff]
      %248 = vset.pattern.permute.xlu0 0
      %249 = vperm.xlu0 %248, %v245
      %v250 = vpop.permute.xlu0 %249
      %vm251 = vcmp.eq.s32.totalorder %v236, %v250
      %v252 = vsel %vm251, %v247, 0.0
      %v253 = vadd.f32 %v246, %v252
      %254 = vst [vmem:[#allocation3] sm:$0xff] %v253
      // Predicated region
      $region37: #{tpu_custom_call.1} parent=31 // pred_check
        %p255 = pneg %p223
      $region38: #{tpu_custom_call.1} parent=31 // pred_check_branch
        %257 = sbr.rel (%p255) target = $region40
      $region39: #{tpu_custom_call.1} parent=31 // pred_region
        %v258 = vld [vmem:[#allocation2] sm:$0xff]
        %259 = vadd.xlane.f32.xlu0 %v258
        %v260 = vpop.xlane.xlu0 %259
        %v261 = vadd.f32 %v260, 1e-20
        %v262 = vld [vmem:[#allocation3] sm:$0xff]
        %263 = vadd.xlane.f32.xlu0 %v262
        %v264 = vpop.xlane.xlu0 %263
        %vm265 = vcmp.eq.s32.totalorder %v230, 0
        %v266 = vsel %vm265, 0.0, %v264
        %v267 = vadd.f32 %v266, 1e-20
        %v268 = vadd.f32 %v267, %v261
        %v269 = vsel %vm265, %v268, %v267
        %v270 = vlog2.pop %v269
        %v271 = vmul.f32 %v270, 0.6931472
        %v272 = vsub.f32 0.0, %v271
        %vm273 = vcmp.eq.s32.totalorder %v229, 1
        %v274 = vsel %vm273, 0.0, %v272
        %vm275 = vcmask 7168
        %276 = vst.msk [vmem:[%s222] sm:$0xff] %vm275, %v274
      $region40: #{tpu_custom_call.1} parent=31 // pred_fallthru
        _
      %p277 = scmp.lt.s32.totalorder %s18, 1
      %s278 = scalar_select %p277, %s18, 1
      %s279 = smul.addr %s278, 8
      %s280 = scalar_lea.vmem %s3, %s279
      // Predicated region
      $region41: #{tpu_custom_call.1} parent=31 // pred_check
        %p281 = pneg %p124
      $region42: #{tpu_custom_call.1} parent=31 // pred_check_branch
        %283 = sbr.rel (%p281) target = $region44
      $region43: #{tpu_custom_call.1} parent=31 // pred_region
        _
      $region44: #{tpu_custom_call.1} parent=31 // pred_fallthru
        _
    $region32: #{tpu_custom_call.1} parent=5 // pred_fallthru
      _
    %p284 = scmp.le.s32.totalorder 2, %s9
    // Predicated region
    $region45: #{tpu_custom_call.1} parent=5 // pred_check
      %p285 = pneg %p284
    $region46: #{tpu_custom_call.1} parent=5 // pred_check_branch
      %287 = sbr.rel (%p285) target = $region48
    $region47: #{tpu_custom_call.1} parent=5 // pred_region
      %s288 = ssub.s32 %s9, 2
      // Predicated region
      $region49: #{tpu_custom_call.1} parent=47 // pred_check
        %p289 = pneg %p130
      $region50: #{tpu_custom_call.1} parent=47 // pred_check_branch
        %291 = sbr.rel (%p289) target = $region52
      $region51: #{tpu_custom_call.1} parent=47 // pred_region
        %p292 = scmp.lt.s32.totalorder %s20, 1
        %s293 = scalar_select %p292, %s20, 1
        %s294 = smul.addr %s293, 8
        %s295 = scalar_lea.vmem %s3, %s294
      $region52: #{tpu_custom_call.1} parent=47 // pred_fallthru
        _
    $region48: #{tpu_custom_call.1} parent=5 // pred_fallthru
      _
  $region6: #{tpu_custom_call.1} parent=0 // loop_footer
    %s13 = sadd.s32 1, %s9
  $region7: #{tpu_custom_call.1} parent=0 // loop_footer_branch
    %8 = sbr.rel target = $region3
  $region8: #{tpu_custom_call.1} parent=0 // loop_exit
    _

</llo_original>
